<compile_context>
chip_gen: v7x
topology: tpu7x:2x2x1
jax: 0.10.0
libtpu: 0.0.40
codegen_flags: <defaults>
</compile_context>

<pallas_src>
import functools

import jax
import jax.numpy as jnp
from jax import lax
from jax.experimental import pallas as pl
from jax.experimental.pallas import tpu as pltpu


# ----------------------------------------------------------------------------
# small helpers
# ----------------------------------------------------------------------------
def _round_up(x, m):
    return ((x + m - 1) // m) * m


def _pad2(a, rows, cols):
    return jnp.pad(a, ((0, rows - a.shape[0]), (0, cols - a.shape[1])))


def _cin_pad(cin):
    # Stem input has 3 channels (never padded); everything else is padded to
    # a multiple of 128 so activations stay lane-dense between layers.
    return cin if cin <= 4 else _round_up(cin, 128)


def _pick_tile(n):
    for cand in (512, 384, 256, 128):
        if n % cand == 0:
            return cand
    return 128


class KeyGen:
    """Deterministic key stream."""

    def __init__(self, seed=0):
        self._key = jax.random.PRNGKey(seed)

    def __call__(self):
        self._key, k = jax.random.split(self._key)
        return k


# ----------------------------------------------------------------------------
# Tiled, epilogue-fused Pallas GEMM (used for every conv via im2col / reshape)
#   out_bf16 = relu?( (A_bf16 @ B_bf16)_f32 + shift [+ residual_bf16] )
# BN scale is pre-folded into B's columns, so the epilogue is just add(+relu).
# ----------------------------------------------------------------------------
def _gemm_epilogue_kernel(*refs, do_relu, has_residual):
    if has_residual:
        a_ref, b_ref, t_ref, r_ref, o_ref, acc_ref = refs
    else:
        a_ref, b_ref, t_ref, o_ref, acc_ref = refs

    k = pl.program_id(2)

    @pl.when(k == 0)
    def _init():
        acc_ref[...] = jnp.zeros_like(acc_ref)

    acc_ref[...] += jnp.dot(a_ref[...], b_ref[...],
                            preferred_element_type=jnp.float32)

    @pl.when(k == pl.num_programs(2) - 1)
    def _finalize():
        out = acc_ref[...] + t_ref[...]
        if has_residual:
            out = out + r_ref[...].astype(jnp.float32)
        if do_relu:
            out = jnp.maximum(out, 0.0)
        o_ref[...] = out.astype(o_ref.dtype)        # f32 math, bf16 store


# Module-level kernel variants (stable identities -> eager dispatch caching).
_GEMM_KERNELS = {
    (r, h): functools.partial(_gemm_epilogue_kernel, do_relu=r, has_residual=h)
    for r in (False, True) for h in (False, True)
}

_VMEM_LIMIT = 48 * 1024 * 1024    # explicit headroom; actual usage ~5 MiB


def fused_matmul(a, wm, shift, residual=None, relu=True):
    """(M,K)@(K,N) with fused shift (+residual) (+ReLU); bf16 in/out, f32 acc.

    wm/shift are pre-packed (K padded to 128 multiple, N padded to 128
    multiple, BN scale folded in).  Returns the (Mp, Np) padded bf16 result;
    callers keep N padded (lane-dense) and only strip M padding.
    """
    a = a.astype(jnp.bfloat16)
    M, K = a.shape
    Kp, Np = wm.shape

    # Tile selection: big tiles (<=512), tm rounded to 16 for bf16 packing.
    tm = min(512, _round_up(max(M, 16), 16))
    Mp = _round_up(M, tm)
    tn = _pick_tile(Np)
    tk = _pick_tile(Kp)
    # v7x megacore: make sure at least one "parallel" axis has >= 2 blocks.
    if (Mp // tm) * (Np // tn) == 1 and Np >= 256 and (Np // 2) % 128 == 0:
        tn = Np // 2

    if Mp > M or Kp > K:
        a = jnp.pad(a, ((0, Mp - M), (0, Kp - K)))

    in_specs = [
        pl.BlockSpec((tm, tk), lambda i, j, k: (i, k)),
        pl.BlockSpec((tk, tn), lambda i, j, k: (k, j)),
        pl.BlockSpec((1, tn), lambda i, j, k: (0, j)),
    ]
    args = [a, wm, shift]

    has_residual = residual is not None
    bytes_accessed = Mp * Kp * 2 + Kp * Np * 2 + Mp * Np * 2 + Np * 4
    if has_residual:
        r_p = residual.astype(jnp.bfloat16)
        if Mp > M:
            r_p = jnp.pad(r_p, ((0, Mp - M), (0, 0)))
        in_specs.append(pl.BlockSpec((tm, tn), lambda i, j, k: (i, j)))
        args.append(r_p)
        bytes_accessed += Mp * Np * 2

    out = pl.pallas_call(
        _GEMM_KERNELS[(bool(relu), has_residual)],
        out_shape=jax.ShapeDtypeStruct((Mp, Np), jnp.bfloat16),
        grid=(Mp // tm, Np // tn, Kp // tk),
        in_specs=in_specs,
        out_specs=pl.BlockSpec((tm, tn), lambda i, j, k: (i, j)),
        scratch_shapes=[pltpu.VMEM((tm, tn), jnp.float32)],
        compiler_params=pltpu.CompilerParams(
            dimension_semantics=("parallel", "parallel", "arbitrary"),
            vmem_limit_bytes=_VMEM_LIMIT),
        cost_estimate=pl.CostEstimate(
            flops=2 * Mp * Np * Kp,
            transcendentals=0,
            bytes_accessed=bytes_accessed),
    )(*args)
    return out


# ----------------------------------------------------------------------------
# Conv (NHWC, bf16, channel-padded) via GEMM with fused BN/ReLU/residual
# ----------------------------------------------------------------------------
def _im2col_nhwc(x, kh, kw, stride, pad):
    """NHWC -> (B*Ho*Wo, kh*kw*C) patch matrix ((kh,kw) outer, C inner)."""
    B, H, W, C = x.shape
    Ho = (H + 2 * pad - kh) // stride + 1
    Wo = (W + 2 * pad - kw) // stride + 1
    xp = jnp.pad(x, ((0, 0), (pad, pad), (pad, pad), (0, 0)))
    cols = []
    for i in range(kh):
        for j in range(kw):
            cols.append(xp[:,
                           i:i + stride * (Ho - 1) + 1:stride,
                           j:j + stride * (Wo - 1) + 1:stride, :])
    p = jnp.concatenate(cols, axis=-1)            # (B, Ho, Wo, kh*kw*C) bf16
    return p.reshape(B * Ho * Wo, kh * kw * C), Ho, Wo


def conv2d_fused(x, packed, stride, pad, residual=None, relu=True):
    """Conv with the following BN (scale folded into weights, shift in the
    epilogue), optional residual add and ReLU fused into the GEMM.  Input and
    output are NHWC bf16 with channels padded to a 128 multiple."""
    B = x.shape[0]
    kh, kw = packed['kh'], packed['kw']
    cout_pad = packed['w'].shape[1]

    if kh == 1 and kw == 1 and pad == 0:
        if stride != 1:
            x = x[:, ::stride, ::stride, :]
        Ho, Wo = x.shape[1], x.shape[2]
        a = x.reshape(B * Ho * Wo, x.shape[3])
    else:
        a, Ho, Wo = _im2col_nhwc(x, kh, kw, stride, pad)

    M = B * Ho * Wo
    res2d = residual.reshape(M, cout_pad) if residual is not None else None

    out = fused_matmul(a, packed['w'], packed['shift'],
                       residual=res2d, relu=relu)
    if out.shape[0] > M:
        out = out[:M]
    return out.reshape(B, Ho, Wo, cout_pad)


def maxpool_3x3_s2_p1(x):
    # NHWC, bf16.  Padded zero channels stay zero.
    init = jnp.array(-jnp.inf, dtype=x.dtype)
    return lax.reduce_window(x, init, lax.max,
                             (1, 3, 3, 1), (1, 2, 2, 1),
                             [(0, 0), (1, 1), (1, 1), (0, 0)])


# ----------------------------------------------------------------------------
# Raw parameter init (eval-mode BN, deterministic random weights)
# ----------------------------------------------------------------------------
def _conv_init(kg, cout, cin, k):
    fan_in = cin * k * k
    return jax.random.normal(kg(), (cout, cin, k, k), jnp.float32) * (2.0 / fan_in) ** 0.5


def _bn_init(kg, c):
    return {
        'gamma': 1.0 + 0.1 * jax.random.normal(kg(), (c,), jnp.float32),
        'beta': 0.05 * jax.random.normal(kg(), (c,), jnp.float32),
        'mean': 0.05 * jax.random.normal(kg(), (c,), jnp.float32),
        'var': 1.0 + 0.1 * jax.random.uniform(kg(), (c,), jnp.float32),
    }


def _linear_init(kg, cin, cout):
    w = jax.random.normal(kg(), (cin, cout), jnp.float32) * (1.0 / cin) ** 0.5
    b = 0.05 * jax.random.normal(kg(), (cout,), jnp.float32)
    return w, b


def make_resnet50_params(kg):
    p = {'conv1': _conv_init(kg, 64, 3, 7), 'bn1': _bn_init(kg, 64), 'layers': []}
    cfg = [(64, 3, 1), (128, 4, 2), (256, 6, 2), (512, 3, 2)]
    inplanes = 64
    for planes, nblocks, stride in cfg:
        blocks = []
        for b in range(nblocks):
            s = stride if b == 0 else 1
            blk = {
                'conv1': _conv_init(kg, planes, inplanes, 1),
                'bn1': _bn_init(kg, planes),
                'conv2': _conv_init(kg, planes, planes, 3),
                'bn2': _bn_init(kg, planes),
                'conv3': _conv_init(kg, planes * 4, planes, 1),
                'bn3': _bn_init(kg, planes * 4),
                'stride': s,
            }
            if s != 1 or inplanes != planes * 4:
                blk['down_conv'] = _conv_init(kg, planes * 4, inplanes, 1)
                blk['down_bn'] = _bn_init(kg, planes * 4)
            blocks.append(blk)
            inplanes = planes * 4
        p['layers'].append(blocks)
    p['fc'] = _linear_init(kg, 2048, 1000)
    return p


def make_head_params(kg):
    return {
        'bn1': _bn_init(kg, 1000),
        'fc1': _linear_init(kg, 1000, 512), 'bn2': _bn_init(kg, 512),
        'fc2': _linear_init(kg, 512, 256), 'bn3': _bn_init(kg, 256),
        'fc3': _linear_init(kg, 256, 64), 'bn4': _bn_init(kg, 64),
        'fc4': _linear_init(kg, 64, 1),
    }


# ----------------------------------------------------------------------------
# One-time weight packing (transpose, channel-pad, BN-scale fold, bf16 cast)
# ----------------------------------------------------------------------------
def pack_conv(w, bn, cin_pad, eps=1e-5):
    Cout, Cin, kh, kw = w.shape
    cout_pad = _round_up(Cout, 128)
    sc = bn['gamma'] / jnp.sqrt(bn['var'] + eps)
    sh = bn['beta'] - bn['mean'] * sc
    wf = (w * sc[:, None, None, None]).transpose(2, 3, 1, 0)   # (kh,kw,Cin,Cout)
    wf = jnp.pad(wf, ((0, 0), (0, 0),
                      (0, cin_pad - Cin), (0, cout_pad - Cout)))
    K = kh * kw * cin_pad
    Kp = _round_up(K, 128)
    wm = wf.reshape(K, cout_pad)
    if Kp > K:
        wm = jnp.pad(wm, ((0, Kp - K), (0, 0)))
    return {
        'w': wm.astype(jnp.bfloat16),
        'shift': jnp.pad(sh, (0, cout_pad - Cout))[None, :].astype(jnp.float32),
        'kh': int(kh), 'kw': int(kw),
    }


def pack_resnet50(p):
    packed = {'conv1': pack_conv(p['conv1'], p['bn1'], cin_pad=3), 'layers': []}
    for layer in p['layers']:
        blocks = []
        for blk in layer:
            pb = {
                'conv1': pack_conv(blk['conv1'], blk['bn1'],
                                   _cin_pad(blk['conv1'].shape[1])),
                'conv2': pack_conv(blk['conv2'], blk['bn2'],
                                   _cin_pad(blk['conv2'].shape[1])),
                'conv3': pack_conv(blk['conv3'], blk['bn3'],
                                   _cin_pad(blk['conv3'].shape[1])),
                'stride': int(blk['stride']),
            }
            if 'down_conv' in blk:
                pb['down'] = pack_conv(blk['down_conv'], blk['down_bn'],
                                       _cin_pad(blk['down_conv'].shape[1]))
            blocks.append(pb)
        packed['layers'].append(blocks)
    return packed


def _fold_linear(w, b, bn, din_p, dout_p, eps=1e-5):
    # bn(x @ w + b) == x @ (w * s) + (b * s + t)
    sc = bn['gamma'] / jnp.sqrt(bn['var'] + eps)
    sh = bn['beta'] - bn['mean'] * sc
    wf = _pad2(w * sc[None, :], din_p, dout_p).astype(jnp.bfloat16)
    bf = _pad2((b * sc + sh)[None, :], 1, dout_p).astype(jnp.float32)
    return wf, bf


def pack_head(resnet_fc, hp):
    Din = 2048
    D0, D1, D2, D3, D4 = 1024, 512, 256, 128, 128   # padded feature widths
    w0, b0 = _fold_linear(resnet_fc[0], resnet_fc[1], hp['bn1'], Din, D0)
    w1, b1 = _fold_linear(hp['fc1'][0], hp['fc1'][1], hp['bn2'], D0, D1)
    w2, b2 = _fold_linear(hp['fc2'][0], hp['fc2'][1], hp['bn3'], D1, D2)
    w3, b3 = _fold_linear(hp['fc3'][0], hp['fc3'][1], hp['bn4'], D2, D3)
    w4 = _pad2(hp['fc4'][0], D3, D4).astype(jnp.bfloat16)
    b4 = _pad2(hp['fc4'][1][None, :], 1, D4).astype(jnp.float32)
    return {'weights': (w0, b0, w1, b1, w2, b2, w3, b3, w4, b4), 'out_dim': D4}


# ----------------------------------------------------------------------------
# ResNet50 backbone forward
# ----------------------------------------------------------------------------
def bottleneck(x, blk):
    if 'down' in blk:
        identity = conv2d_fused(x, blk['down'], blk['stride'], 0, relu=False)
    else:
        identity = x
    out = conv2d_fused(x, blk['conv1'], 1, 0, relu=True)
    out = conv2d_fused(out, blk['conv2'], blk['stride'], 1, relu=True)
    # conv3: BN + residual add + ReLU all fused into the GEMM epilogue.
    out = conv2d_fused(out, blk['conv3'], 1, 0, residual=identity, relu=True)
    return out


def resnet50_features(x_nchw, p):
    """Returns the (B, 2048) globally-pooled features (fc fused into head)."""
    x = jnp.transpose(x_nchw, (0, 2, 3, 1)).astype(jnp.bfloat16)   # once
    out = conv2d_fused(x, p['conv1'], 2, 3, relu=True)
    out = maxpool_3x3_s2_p1(out)
    for layer in p['layers']:
        for blk in layer:
            out = bottleneck(out, blk)
    # global average pool (f32 math on a tiny tensor)
    return jnp.mean(out.astype(jnp.float32), axis=(1, 2))           # (B, 2048)


# ----------------------------------------------------------------------------
# Fused FC head kernel: resnet_fc(+bn1)/relu -> fc1(+bn2)/relu -> fc2(+bn3)/relu
#                       -> fc3(+bn4)/relu -> fc4.  Weights are pre-packed bf16
#                       with the BN1d's folded in; body is 5 MXU dots + 4 ReLUs.
# ----------------------------------------------------------------------------
def _head_kernel(x_ref, w0, b0, w1, b1, w2, b2, w3, b3, w4, b4, o_ref):
    h = jnp.dot(x_ref[...], w0[...], preferred_element_type=jnp.float32) + b0[...]
    h = jnp.maximum(h, 0.0)
    h = jnp.dot(h.astype(jnp.bfloat16), w1[...],
                preferred_element_type=jnp.float32) + b1[...]
    h = jnp.maximum(h, 0.0)
    h = jnp.dot(h.astype(jnp.bfloat16), w2[...],
                preferred_element_type=jnp.float32) + b2[...]
    h = jnp.maximum(h, 0.0)
    h = jnp.dot(h.astype(jnp.bfloat16), w3[...],
                preferred_element_type=jnp.float32) + b3[...]
    h = jnp.maximum(h, 0.0)
    o_ref[...] = jnp.dot(h.astype(jnp.bfloat16), w4[...],
                         preferred_element_type=jnp.float32) + b4[...]


def head_forward(feat, hp):
    """feat: (B, 2048) pooled backbone features -> (B, 1)."""
    B, Din = feat.shape
    Bp = _round_up(max(B, 16), 16)
    x = jnp.pad(feat, ((0, Bp - B), (0, 0))).astype(jnp.bfloat16)
    args = (x,) + hp['weights']

    out = pl.pallas_call(
        _head_kernel,
        out_shape=jax.ShapeDtypeStruct((Bp, hp['out_dim']), jnp.float32),
        grid=(1,),
        in_specs=[pl.BlockSpec(a.shape, lambda i: (0, 0)) for a in args],
        out_specs=pl.BlockSpec((Bp, hp['out_dim']), lambda i: (0, 0)),
        compiler_params=pltpu.CompilerParams(vmem_limit_bytes=_VMEM_LIMIT),
    )(*args)
    return out[:B, :1]                        # (B, 1)


# ----------------------------------------------------------------------------
# Full TransferModel forward
# ----------------------------------------------------------------------------
def transfer_model_forward(x, resnet_packed, head_packed):
    feat = resnet50_features(x, resnet_packed)        # (B, 2048)
    return head_forward(feat, head_packed)            # (B, 1)


if __name__ == "__main__":
    kg = KeyGen(0)
    raw_resnet = make_resnet50_params(kg)
    raw_head = make_head_params(kg)

    # One-time packing (transpose/pad/bf16/BN-fold) -- not part of the forward.
    resnet_packed = pack_resnet50(raw_resnet)
    head_packed = pack_head(raw_resnet['fc'], raw_head)

    x = jax.random.normal(jax.random.PRNGKey(0), (2, 3, 16, 16), jnp.float32)

    out = transfer_model_forward(x, resnet_packed, head_packed)
    out = jax.block_until_ready(out)

    assert out.shape == (2, 1), out.shape
    assert bool(jnp.all(jnp.isfinite(out)))
    print("KERNEL_OK")
</pallas_src>

<mosaic_0001>
module attributes {stable_mosaic.version = 11 : i64} {
  func.func @_gemm_epilogue_kernel(%arg0: i32, %arg1: i32, %arg2: i32, %arg3: memref<128x256xbf16, #tpu.memory_space<vmem>>, %arg4: memref<256x128xbf16, #tpu.memory_space<vmem>>, %arg5: memref<1x128xf32, #tpu.memory_space<vmem>>, %arg6: memref<128x128xbf16, #tpu.memory_space<vmem>>, %arg7: memref<128x128xf32, #tpu.memory_space<vmem>>) attributes {dimension_semantics = [#tpu.dimension_semantics<parallel>, #tpu.dimension_semantics<parallel>, #tpu.dimension_semantics<arbitrary>], iteration_bounds = array<i64: 1, 1, 1>, scalar_prefetch = 0 : i64, scratch_operands = 1 : i64, tpu.core_type = #tpu.core_type<tc>, window_params = [{transform_indices = @transform_0, window_bounds = array<i64: 128, 256>}, {transform_indices = @transform_1, window_bounds = array<i64: 256, 128>}, {transform_indices = @transform_2, window_bounds = array<i64: 1, 128>}, {transform_indices = @transform_3, window_bounds = array<i64: 128, 128>}]} {
    %c0_i32 = arith.constant 0 : i32
    %0 = arith.cmpi eq, %arg2, %c0_i32 : i32
    %1 = arith.extui %0 : i1 to i32
    %c0_i32_0 = arith.constant 0 : i32
    %2 = arith.cmpi ne, %1, %c0_i32_0 : i32
    scf.if %2 {
      %cst_10 = arith.constant 0.000000e+00 : f32
      %12 = vector.broadcast %cst_10 : f32 to vector<128x128xf32>
      %c0_11 = arith.constant 0 : index
      %c0_12 = arith.constant 0 : index
      %13 = vector.load %arg7[%c0_11, %c0_12] : memref<128x128xf32, #tpu.memory_space<vmem>>, vector<128x128xf32>
      tpu.vector_store %arg7[%c0_11, %c0_12], %12 {strides = array<i32>} : memref<128x128xf32, #tpu.memory_space<vmem>>, vector<128x128xf32>,
    } else {
    }
    %c0 = arith.constant 0 : index
    %c0_1 = arith.constant 0 : index
    %3 = vector.load %arg7[%c0, %c0_1] : memref<128x128xf32, #tpu.memory_space<vmem>>, vector<128x128xf32>
    %c0_2 = arith.constant 0 : index
    %c0_3 = arith.constant 0 : index
    %4 = vector.load %arg3[%c0_2, %c0_3] : memref<128x256xbf16, #tpu.memory_space<vmem>>, vector<128x256xbf16>
    %c0_4 = arith.constant 0 : index
    %c0_5 = arith.constant 0 : index
    %5 = vector.load %arg4[%c0_4, %c0_5] : memref<256x128xbf16, #tpu.memory_space<vmem>>, vector<256x128xbf16>
    %cst = arith.constant dense<0.000000e+00> : vector<128x128xf32>
    %6 = tpu.matmul %4, %5, %cst {dimension_numbers = #tpu.dot_dimension_numbers<[1], [0], [0], [1], [0, 0, 1, 1], [], []>} : vector<128x256xbf16>, vector<256x128xbf16>, vector<128x128xf32> -> vector<128x128xf32>
    %7 = arith.addf %3, %6 : vector<128x128xf32>
    %c0_6 = arith.constant 0 : index
    %c0_7 = arith.constant 0 : index
    %8 = vector.load %arg7[%c0_6, %c0_7] : memref<128x128xf32, #tpu.memory_space<vmem>>, vector<128x128xf32>
    tpu.vector_store %arg7[%c0_6, %c0_7], %7 {strides = array<i32>} : memref<128x128xf32, #tpu.memory_space<vmem>>, vector<128x128xf32>,
    %c0_i32_8 = arith.constant 0 : i32
    %9 = arith.cmpi eq, %arg2, %c0_i32_8 : i32
    %10 = arith.extui %9 : i1 to i32
    %c0_i32_9 = arith.constant 0 : i32
    %11 = arith.cmpi ne, %10, %c0_i32_9 : i32
    scf.if %11 {
      %c0_10 = arith.constant 0 : index
      %c0_11 = arith.constant 0 : index
      %12 = vector.load %arg7[%c0_10, %c0_11] : memref<128x128xf32, #tpu.memory_space<vmem>>, vector<128x128xf32>
      %c0_12 = arith.constant 0 : index
      %c0_13 = arith.constant 0 : index
      %13 = vector.load %arg5[%c0_12, %c0_13] : memref<1x128xf32, #tpu.memory_space<vmem>>, vector<1x128xf32>
      %14 = vector.broadcast %13 : vector<1x128xf32> to vector<128x128xf32>
      %15 = arith.addf %12, %14 : vector<128x128xf32>
      %cst_14 = arith.constant 0.000000e+00 : f32
      %16 = vector.broadcast %cst_14 : f32 to vector<128x128xf32>
      %17 = arith.maximumf %15, %16 : vector<128x128xf32>
      %18 = arith.truncf %17 : vector<128x128xf32> to vector<128x128xbf16>
      %c0_15 = arith.constant 0 : index
      %c0_16 = arith.constant 0 : index
      %19 = vector.load %arg6[%c0_15, %c0_16] : memref<128x128xbf16, #tpu.memory_space<vmem>>, vector<128x128xbf16>
      tpu.vector_store %arg6[%c0_15, %c0_16], %18 {strides = array<i32>} : memref<128x128xbf16, #tpu.memory_space<vmem>>, vector<128x128xbf16>,
    } else {
    }
    return
  }
  func.func @transform_0(%arg0: i32, %arg1: i32, %arg2: i32) -> (i32, i32) {
    %c0_i32 = arith.constant 0 : i32
    return %arg0, %arg2 : i32, i32
  }
  func.func @transform_1(%arg0: i32, %arg1: i32, %arg2: i32) -> (i32, i32) {
    %c0_i32 = arith.constant 0 : i32
    return %arg2, %arg1 : i32, i32
  }
  func.func @transform_2(%arg0: i32, %arg1: i32, %arg2: i32) -> (i32, i32) {
    %c0_i32 = arith.constant 0 : i32
    %c0_i32_0 = arith.constant 0 : i32
    return %c0_i32, %arg1 : i32, i32
  }
  func.func @transform_3(%arg0: i32, %arg1: i32, %arg2: i32) -> (i32, i32) {
    %c0_i32 = arith.constant 0 : i32
    return %arg0, %arg1 : i32, i32
  }
}

</mosaic_0001>

<llo_original>
// kernel: tpu_custom_call.1
$region0: #{tpu_custom_call.1}
  #allocation0 [shape = 'u32[]', space=smem, size = 0x4, offset = 0x4, fixed_abs, tag = 'smem constant byte address 0x4 - core index']
  #allocation1 [shape = 'u32[144,128]{1,0:T(1,128)}', space=vmem, size = 0x12000, scoped, tag = 'internal scratch']
  #allocation2 [shape = 'f32[128,128]{1,0:T(8,128)}', space=vmem, size = 0x10000, scoped, tag = 'scratch operand']
  %s0 = inlined_call_operand.hbm [shape: bf16[128,256], index: 0, kind: input, shape index: {}]
  %s1 = inlined_call_operand.hbm [shape: bf16[256,128], index: 1, kind: input, shape index: {}]
  %s2 = inlined_call_operand.vmem [shape: f32[1,128], index: 2, kind: input, shape index: {}]
  %s3 = inlined_call_operand.hbm [shape: bf16[128,128], index: 3, kind: output, shape index: {}]
  %s4 = sld [smem:[#allocation0]]
  $region38: #{tpu_custom_call.1} parent=0
    _
  %s6 = ssub.s32 1, %s4
  %s7 = scalar_select 0, %s6, %s4
  $region1: #{tpu_custom_call.1} parent=0
    #allocation3 [shape = 'u8[65536]{0}', space=vmem, size = 0x10000, scoped, tag = 'input window, operand 0, single buffered']
    #allocation4 [shape = 's32[1]{0}', space=sflag, size = 0x4, scoped, tag = 'scoped memory for tpu_custom_call.1']
    #allocation5 [shape = 's32[1]{0}', space=sflag, size = 0x4, scoped, tag = 'scoped memory for tpu_custom_call.1']
    #allocation6 [shape = 'u8[65536]{0}', space=vmem, size = 0x10000, scoped, tag = 'input window, operand 1, single buffered']
    #allocation7 [shape = 's32[1]{0}', space=sflag, size = 0x4, scoped, tag = 'scoped memory for tpu_custom_call.1']
    #allocation8 [shape = 'u8[32768]{0}', space=vmem, size = 0x8000, scoped, tag = 'output window, operand 0, single buffered']
    %8 = vsyncpa [#allocation4], 0
    %9 = vsyncpa [#allocation7], 0
    %10 = vsyncpa [#allocation5], 0
    // Predicated region
    $region2: #{tpu_custom_call.1} parent=1 // pred_check
      _
    $region3: #{tpu_custom_call.1} parent=1 // pred_check_branch
      %12 = sbr.rel (0) target = $region5
    $region4: #{tpu_custom_call.1} parent=1 // pred_region
      %s14 = ssub.s32 2048, 2048
      %15 = vsyncadd [#allocation4], %s14
      %s16 = sshll.u32 [#allocation3], 4
      %s17 = int_to_ptr.vmem [resolvable:$true] %s16
      %22 = dma.hbm_to_vmem [thread:$0]  %s0, 2048, %s17, [#allocation4], 128, 128, 8
    $region5: #{tpu_custom_call.1} parent=1 // pred_fallthru
      _
    // Predicated region
    $region6: #{tpu_custom_call.1} parent=1 // pred_check
      _
    $region7: #{tpu_custom_call.1} parent=1 // pred_check_branch
      %24 = sbr.rel (0) target = $region9
    $region8: #{tpu_custom_call.1} parent=1 // pred_region
      %s26 = ssub.s32 2048, 2048
      %27 = vsyncadd [#allocation7], %s26
      %s28 = sshll.u32 [#allocation6], 4
      %s29 = int_to_ptr.vmem [resolvable:$true] %s28
      %34 = dma.hbm_to_vmem [thread:$0]  %s1, 2048, %s29, [#allocation7], 64, 64, 4
    $region9: #{tpu_custom_call.1} parent=1 // pred_fallthru
      _
    // Predicated region
    $region10: #{tpu_custom_call.1} parent=1 // pred_check
      _
    $region11: #{tpu_custom_call.1} parent=1 // pred_check_branch
      %36 = sbr.rel (0) target = $region13
    $region12: #{tpu_custom_call.1} parent=1 // pred_region
      _
    $region13: #{tpu_custom_call.1} parent=1 // pred_fallthru
      _
    // Predicated region
    $region14: #{tpu_custom_call.1} parent=1 // pred_check
      _
    $region15: #{tpu_custom_call.1} parent=1 // pred_check_branch
      %38 = sbr.rel (0) target = $region17
    $region16: #{tpu_custom_call.1} parent=1 // pred_region
      %39 = dma.done [#allocation4], 2048
    $region17: #{tpu_custom_call.1} parent=1 // pred_fallthru
      _
    // Predicated region
    $region18: #{tpu_custom_call.1} parent=1 // pred_check
      _
    $region19: #{tpu_custom_call.1} parent=1 // pred_check_branch
      %41 = sbr.rel (0) target = $region21
    $region20: #{tpu_custom_call.1} parent=1 // pred_region
      %42 = dma.done [#allocation7], 2048
    $region21: #{tpu_custom_call.1} parent=1 // pred_fallthru
      _
    %p44 = scmp.eq.s32.totalorder 0, 0
    // Predicated region
    $region22: #{tpu_custom_call.1} parent=1 // pred_check
      %p45 = pneg %p44
    $region23: #{tpu_custom_call.1} parent=1 // pred_check_branch
      %47 = sbr.rel (%p45) target = $region25
    $region24: #{tpu_custom_call.1} parent=1 // pred_region
      %48 = vst [vmem:[#allocation2] sm:$0xff] 0.0
      %49 = vst [vmem:[#allocation2 + $0x8] sm:$0xff] 0.0
      %50 = vst [vmem:[#allocation2 + $0x10] sm:$0xff] 0.0
      %51 = vst [vmem:[#allocation2 + $0x18] sm:$0xff] 0.0
      %52 = vst [vmem:[#allocation2 + $0x20] sm:$0xff] 0.0
      %53 = vst [vmem:[#allocation2 + $0x28] sm:$0xff] 0.0
      %54 = vst [vmem:[#allocation2 + $0x30] sm:$0xff] 0.0
      %55 = vst [vmem:[#allocation2 + $0x38] sm:$0xff] 0.0
      %56 = vst [vmem:[#allocation2 + $0x40] sm:$0xff] 0.0
      %57 = vst [vmem:[#allocation2 + $0x48] sm:$0xff] 0.0
      %58 = vst [vmem:[#allocation2 + $0x50] sm:$0xff] 0.0
      %59 = vst [vmem:[#allocation2 + $0x58] sm:$0xff] 0.0
      %60 = vst [vmem:[#allocation2 + $0x60] sm:$0xff] 0.0
      %61 = vst [vmem:[#allocation2 + $0x68] sm:$0xff] 0.0
      %62 = vst [vmem:[#allocation2 + $0x70] sm:$0xff] 0.0
      %63 = vst [vmem:[#allocation2 + $0x78] sm:$0xff] 0.0
    $region25: #{tpu_custom_call.1} parent=1 // pred_fallthru
      _
    %v64 = vld [vmem:[#allocation2] sm:$0xff]
    %v65 = vld [vmem:[#allocation2 + $0x8] sm:$0xff]
    %v66 = vld [vmem:[#allocation2 + $0x10] sm:$0xff]
    %v67 = vld [vmem:[#allocation2 + $0x18] sm:$0xff]
    %v68 = vld [vmem:[#allocation2 + $0x20] sm:$0xff]
    %v69 = vld [vmem:[#allocation2 + $0x28] sm:$0xff]
    %v70 = vld [vmem:[#allocation2 + $0x30] sm:$0xff]
    %v71 = vld [vmem:[#allocation2 + $0x38] sm:$0xff]
    %v72 = vld [vmem:[#allocation2 + $0x40] sm:$0xff]
    %v73 = vld [vmem:[#allocation2 + $0x48] sm:$0xff]
    %v74 = vld [vmem:[#allocation2 + $0x50] sm:$0xff]
    %v75 = vld [vmem:[#allocation2 + $0x58] sm:$0xff]
    %v76 = vld [vmem:[#allocation2 + $0x60] sm:$0xff]
    %v77 = vld [vmem:[#allocation2 + $0x68] sm:$0xff]
    %v78 = vld [vmem:[#allocation2 + $0x70] sm:$0xff]
    %v79 = vld [vmem:[#allocation2 + $0x78] sm:$0xff]
    %v80 = vld [vmem:[#allocation3] sm:$0xff]
    %v81 = vld [vmem:[#allocation3 + $0x8] sm:$0xff]
    %v82 = vld [vmem:[#allocation3 + $0x10] sm:$0xff]
    %v83 = vld [vmem:[#allocation3 + $0x18] sm:$0xff]
    %v84 = vld [vmem:[#allocation3 + $0x20] sm:$0xff]
    %v85 = vld [vmem:[#allocation3 + $0x28] sm:$0xff]
    %v86 = vld [vmem:[#allocation3 + $0x30] sm:$0xff]
    %v87 = vld [vmem:[#allocation3 + $0x38] sm:$0xff]
    %v88 = vld [vmem:[#allocation3 + $0x40] sm:$0xff]
    %v89 = vld [vmem:[#allocation3 + $0x48] sm:$0xff]
    %v90 = vld [vmem:[#allocation3 + $0x50] sm:$0xff]
    %v91 = vld [vmem:[#allocation3 + $0x58] sm:$0xff]
    %v92 = vld [vmem:[#allocation3 + $0x60] sm:$0xff]
    %v93 = vld [vmem:[#allocation3 + $0x68] sm:$0xff]
    %v94 = vld [vmem:[#allocation3 + $0x70] sm:$0xff]
    %v95 = vld [vmem:[#allocation3 + $0x78] sm:$0xff]
    %v96 = vld [vmem:[#allocation6] sm:$0xf]
    %v97 = vld [vmem:[#allocation6 + $0x4] sm:$0xf]
    %v98 = vld [vmem:[#allocation6 + $0x8] sm:$0xf]
    %v99 = vld [vmem:[#allocation6 + $0xc] sm:$0xf]
    %v100 = vld [vmem:[#allocation6 + $0x10] sm:$0xf]
    %v101 = vld [vmem:[#allocation6 + $0x14] sm:$0xf]
    %v102 = vld [vmem:[#allocation6 + $0x18] sm:$0xf]
    %v103 = vld [vmem:[#allocation6 + $0x1c] sm:$0xf]
    %v104 = vld [vmem:[#allocation6 + $0x20] sm:$0xf]
    %v105 = vld [vmem:[#allocation6 + $0x24] sm:$0xf]
    %v106 = vld [vmem:[#allocation6 + $0x28] sm:$0xf]
    %v107 = vld [vmem:[#allocation6 + $0x2c] sm:$0xf]
    %v108 = vld [vmem:[#allocation6 + $0x30] sm:$0xf]
    %v109 = vld [vmem:[#allocation6 + $0x34] sm:$0xf]
    %v110 = vld [vmem:[#allocation6 + $0x38] sm:$0xf]
    %v111 = vld [vmem:[#allocation6 + $0x3c] sm:$0xf]
    %v112 = vld [vmem:[#allocation6 + $0x40] sm:$0xf]
    %v113 = vld [vmem:[#allocation6 + $0x44] sm:$0xf]
    %v114 = vld [vmem:[#allocation6 + $0x48] sm:$0xf]
    %v115 = vld [vmem:[#allocation6 + $0x4c] sm:$0xf]
    %v116 = vld [vmem:[#allocation6 + $0x50] sm:$0xf]
    %v117 = vld [vmem:[#allocation6 + $0x54] sm:$0xf]
    %v118 = vld [vmem:[#allocation6 + $0x58] sm:$0xf]
    %v119 = vld [vmem:[#allocation6 + $0x5c] sm:$0xf]
    %v120 = vld [vmem:[#allocation6 + $0x60] sm:$0xf]
    %v121 = vld [vmem:[#allocation6 + $0x64] sm:$0xf]
    %v122 = vld [vmem:[#allocation6 + $0x68] sm:$0xf]
    %v123 = vld [vmem:[#allocation6 + $0x6c] sm:$0xf]
    %v124 = vld [vmem:[#allocation6 + $0x70] sm:$0xf]
    %v125 = vld [vmem:[#allocation6 + $0x74] sm:$0xf]
    %v126 = vld [vmem:[#allocation6 + $0x78] sm:$0xf]
    %v127 = vld [vmem:[#allocation6 + $0x7c] sm:$0xf]
    %v144 = vunpack.c.l.b16 %v80
    %v145 = vunpack.c.h.b16 %v80
    %v146 = vunpack.c.l.b16 %v81
    %v147 = vunpack.c.h.b16 %v81
    %v148 = vunpack.c.l.b16 %v82
    %v149 = vunpack.c.h.b16 %v82
    %v150 = vunpack.c.l.b16 %v83
    %v151 = vunpack.c.h.b16 %v83
    %v152 = vunpack.c.l.b16 %v84
    %v153 = vunpack.c.h.b16 %v84
    %v154 = vunpack.c.l.b16 %v85
    %v155 = vunpack.c.h.b16 %v85
    %v156 = vunpack.c.l.b16 %v86
    %v157 = vunpack.c.h.b16 %v86
    %v158 = vunpack.c.l.b16 %v87
    %v159 = vunpack.c.h.b16 %v87
    %v160 = vunpack.c.l.b16 %v88
    %v161 = vunpack.c.h.b16 %v88
    %v162 = vunpack.c.l.b16 %v89
    %v163 = vunpack.c.h.b16 %v89
    %v164 = vunpack.c.l.b16 %v90
    %v165 = vunpack.c.h.b16 %v90
    %v166 = vunpack.c.l.b16 %v91
    %v167 = vunpack.c.h.b16 %v91
    %v168 = vunpack.c.l.b16 %v92
    %v169 = vunpack.c.h.b16 %v92
    %v170 = vunpack.c.l.b16 %v93
    %v171 = vunpack.c.h.b16 %v93
    %v172 = vunpack.c.l.b16 %v94
    %v173 = vunpack.c.h.b16 %v94
    %v174 = vunpack.c.l.b16 %v95
    %v175 = vunpack.c.h.b16 %v95
    %v176 = vpack.c.b16 %v146, %v144
    %v177 = vpack.c.b16 %v147, %v145
    %v178 = vpack.c.b16 %v150, %v148
    %v179 = vpack.c.b16 %v151, %v149
    %v180 = vpack.c.b16 %v154, %v152
    %v181 = vpack.c.b16 %v155, %v153
    %v182 = vpack.c.b16 %v158, %v156
    %v183 = vpack.c.b16 %v159, %v157
    %v184 = vpack.c.b16 %v162, %v160
    %v185 = vpack.c.b16 %v163, %v161
    %v186 = vpack.c.b16 %v166, %v164
    %v187 = vpack.c.b16 %v167, %v165
    %v188 = vpack.c.b16 %v170, %v168
    %v189 = vpack.c.b16 %v171, %v169
    %v190 = vpack.c.b16 %v174, %v172
    %v191 = vpack.c.b16 %v175, %v173
    %v240 = vunpack.c.l.b16 %v96
    %v241 = vunpack.c.l.b16 %v97
    %v242 = vunpack.c.l.b16 %v98
    %v243 = vunpack.c.l.b16 %v99
    %v244 = vunpack.c.l.b16 %v100
    %v245 = vunpack.c.l.b16 %v101
    %v246 = vunpack.c.l.b16 %v102
    %v247 = vunpack.c.l.b16 %v103
    %v248 = vunpack.c.l.b16 %v104
    %v249 = vunpack.c.l.b16 %v105
    %v250 = vunpack.c.l.b16 %v106
    %v251 = vunpack.c.l.b16 %v107
    %v252 = vunpack.c.l.b16 %v108
    %v253 = vunpack.c.l.b16 %v109
    %v254 = vunpack.c.l.b16 %v110
    %v255 = vunpack.c.l.b16 %v111
    %v256 = vunpack.c.l.b16 %v112
    %v257 = vunpack.c.l.b16 %v113
    %v258 = vunpack.c.l.b16 %v114
    %v259 = vunpack.c.l.b16 %v115
    %v260 = vunpack.c.l.b16 %v116
    %v261 = vunpack.c.l.b16 %v117
    %v262 = vunpack.c.l.b16 %v118
    %v263 = vunpack.c.l.b16 %v119
    %v264 = vunpack.c.l.b16 %v120
    %v265 = vunpack.c.l.b16 %v121
    %v266 = vunpack.c.l.b16 %v122
    %v267 = vunpack.c.l.b16 %v123
    %v268 = vunpack.c.l.b16 %v124
    %v269 = vunpack.c.l.b16 %v125
    %v270 = vunpack.c.l.b16 %v126
    %v271 = vunpack.c.l.b16 %v127
    %v272 = vpack.c.b16 %v241, %v240
    %v273 = vpack.c.b16 %v243, %v242
    %v274 = vpack.c.b16 %v245, %v244
    %v275 = vpack.c.b16 %v247, %v246
    %v276 = vpack.c.b16 %v249, %v248
    %v277 = vpack.c.b16 %v251, %v250
    %v278 = vpack.c.b16 %v253, %v252
    %v279 = vpack.c.b16 %v255, %v254
    %v280 = vpack.c.b16 %v257, %v256
    %v281 = vpack.c.b16 %v259, %v258
    %v282 = vpack.c.b16 %v261, %v260
    %v283 = vpack.c.b16 %v263, %v262
    %v284 = vpack.c.b16 %v265, %v264
    %v285 = vpack.c.b16 %v267, %v266
    %v286 = vpack.c.b16 %v269, %v268
    %v287 = vpack.c.b16 %v271, %v270
    %304 = vmatprep.subr.bf16.mxu0 0
    %305 = vmatpush1.bf16.msra.mxu0 %v272
    %306 = vmatprep.subr.bf16.mxu0 0
    %307 = vmatpush1.bf16.msra.mxu0 %v273
    %308 = vmatprep.subr.bf16.mxu0 0
    %309 = vmatpush1.bf16.msra.mxu0 %v274
    %310 = vmatprep.subr.bf16.mxu0 0
    %311 = vmatpush1.bf16.msra.mxu0 %v275
    %312 = vmatprep.subr.bf16.mxu0 0
    %313 = vmatpush1.bf16.msra.mxu0 %v276
    %314 = vmatprep.subr.bf16.mxu0 0
    %315 = vmatpush1.bf16.msra.mxu0 %v277
    %316 = vmatprep.subr.bf16.mxu0 0
    %317 = vmatpush1.bf16.msra.mxu0 %v278
    %318 = vmatprep.subr.bf16.mxu0 0
    %319 = vmatpush1.bf16.msra.mxu0 %v279
    %320 = vmatprep.subr.bf16.mxu0 0
    %321 = vmatpush1.bf16.msra.mxu0 %v280
    %322 = vmatprep.subr.bf16.mxu0 0
    %323 = vmatpush1.bf16.msra.mxu0 %v281
    %324 = vmatprep.subr.bf16.mxu0 0
    %325 = vmatpush1.bf16.msra.mxu0 %v282
    %326 = vmatprep.subr.bf16.mxu0 0
    %327 = vmatpush1.bf16.msra.mxu0 %v283
    %328 = vmatprep.subr.bf16.mxu0 0
    %329 = vmatpush1.bf16.msra.mxu0 %v284
    %330 = vmatprep.subr.bf16.mxu0 0
    %331 = vmatpush1.bf16.msra.mxu0 %v285
    %332 = vmatprep.subr.bf16.mxu0 0
    %333 = vmatpush1.bf16.msra.mxu0 %v286
    %334 = vmatprep.subr.bf16.mxu0 0
    %335 = vmatpush1.bf16.msra.mxu0 %v287
    %336 = vmatprep.mubr.bf16.mxu0 %v177
    %337 = vmatmul.mubr.bf16.gmra.mrb[0].mxu0 %v176
    %v338 = vpop.f32.mrb[0].mxu0
    %v339 = vadd.f32 0.0, %v338
    %v340 = vpop.f32.mrb[0].mxu0
    %v341 = vpop.f32.mrb[0].mxu0
    %v342 = vadd.f32 0.0, %v341
    %v343 = vpop.f32.mrb[0].mxu0
    %344 = vmatprep.mubr.bf16.mxu0 %v179
    %345 = vmatmul.mubr.bf16.gmra.mrb[0].mxu0 %v178
    %v346 = vpop.f32.mrb[0].mxu0
    %v347 = vadd.f32 0.0, %v346
    %v348 = vpop.f32.mrb[0].mxu0
    %v349 = vpop.f32.mrb[0].mxu0
    %v350 = vadd.f32 0.0, %v349
    %v351 = vpop.f32.mrb[0].mxu0
    %352 = vmatprep.mubr.bf16.mxu0 %v181
    %353 = vmatmul.mubr.bf16.gmra.mrb[0].mxu0 %v180
    %v354 = vpop.f32.mrb[0].mxu0
    %v355 = vadd.f32 0.0, %v354
    %v356 = vpop.f32.mrb[0].mxu0
    %v357 = vpop.f32.mrb[0].mxu0
    %v358 = vadd.f32 0.0, %v357
    %v359 = vpop.f32.mrb[0].mxu0
    %360 = vmatprep.mubr.bf16.mxu0 %v183
    %361 = vmatmul.mubr.bf16.gmra.mrb[0].mxu0 %v182
    %v362 = vpop.f32.mrb[0].mxu0
    %v363 = vadd.f32 0.0, %v362
    %v364 = vpop.f32.mrb[0].mxu0
    %v365 = vpop.f32.mrb[0].mxu0
    %v366 = vadd.f32 0.0, %v365
    %v367 = vpop.f32.mrb[0].mxu0
    %368 = vmatprep.mubr.bf16.mxu0 %v185
    %369 = vmatmul.mubr.bf16.gmra.mrb[0].mxu0 %v184
    %v370 = vpop.f32.mrb[0].mxu0
    %v371 = vadd.f32 0.0, %v370
    %v372 = vpop.f32.mrb[0].mxu0
    %v373 = vpop.f32.mrb[0].mxu0
    %v374 = vadd.f32 0.0, %v373
    %v375 = vpop.f32.mrb[0].mxu0
    %376 = vmatprep.mubr.bf16.mxu0 %v187
    %377 = vmatmul.mubr.bf16.gmra.mrb[0].mxu0 %v186
    %v378 = vpop.f32.mrb[0].mxu0
    %v379 = vadd.f32 0.0, %v378
    %v380 = vpop.f32.mrb[0].mxu0
    %v381 = vpop.f32.mrb[0].mxu0
    %v382 = vadd.f32 0.0, %v381
    %v383 = vpop.f32.mrb[0].mxu0
    %384 = vmatprep.mubr.bf16.mxu0 %v189
    %385 = vmatmul.mubr.bf16.gmra.mrb[0].mxu0 %v188
    %v386 = vpop.f32.mrb[0].mxu0
    %v387 = vadd.f32 0.0, %v386
    %v388 = vpop.f32.mrb[0].mxu0
    %v389 = vpop.f32.mrb[0].mxu0
    %v390 = vadd.f32 0.0, %v389
    %v391 = vpop.f32.mrb[0].mxu0
    %392 = vmatprep.mubr.bf16.mxu0 %v191
    %393 = vmatmul.mubr.bf16.gmra.mrb[0].mxu0 %v190
    %v394 = vpop.f32.mrb[0].mxu0
    %v395 = vadd.f32 0.0, %v394
    %v396 = vpop.f32.mrb[0].mxu0
    %v397 = vpop.f32.mrb[0].mxu0
    %v398 = vadd.f32 0.0, %v397
    %v399 = vpop.f32.mrb[0].mxu0
    %400 = vdwg.mxu0
    %v401 = vadd.f32 %v64, %v339
    %v402 = vadd.f32 %v65, %v342
    %v403 = vadd.f32 %v66, %v347
    %v404 = vadd.f32 %v67, %v350
    %v405 = vadd.f32 %v68, %v355
    %v406 = vadd.f32 %v69, %v358
    %v407 = vadd.f32 %v70, %v363
    %v408 = vadd.f32 %v71, %v366
    %v409 = vadd.f32 %v72, %v371
    %v410 = vadd.f32 %v73, %v374
    %v411 = vadd.f32 %v74, %v379
    %v412 = vadd.f32 %v75, %v382
    %v413 = vadd.f32 %v76, %v387
    %v414 = vadd.f32 %v77, %v390
    %v415 = vadd.f32 %v78, %v395
    %v416 = vadd.f32 %v79, %v398
    %417 = vst [vmem:[#allocation2] sm:$0xff] %v401
    %418 = vst [vmem:[#allocation2 + $0x8] sm:$0xff] %v402
    %419 = vst [vmem:[#allocation2 + $0x10] sm:$0xff] %v403
    %420 = vst [vmem:[#allocation2 + $0x18] sm:$0xff] %v404
    %421 = vst [vmem:[#allocation2 + $0x20] sm:$0xff] %v405
    %422 = vst [vmem:[#allocation2 + $0x28] sm:$0xff] %v406
    %423 = vst [vmem:[#allocation2 + $0x30] sm:$0xff] %v407
    %424 = vst [vmem:[#allocation2 + $0x38] sm:$0xff] %v408
    %425 = vst [vmem:[#allocation2 + $0x40] sm:$0xff] %v409
    %426 = vst [vmem:[#allocation2 + $0x48] sm:$0xff] %v410
    %427 = vst [vmem:[#allocation2 + $0x50] sm:$0xff] %v411
    %428 = vst [vmem:[#allocation2 + $0x58] sm:$0xff] %v412
    %429 = vst [vmem:[#allocation2 + $0x60] sm:$0xff] %v413
    %430 = vst [vmem:[#allocation2 + $0x68] sm:$0xff] %v414
    %431 = vst [vmem:[#allocation2 + $0x70] sm:$0xff] %v415
    %432 = vst [vmem:[#allocation2 + $0x78] sm:$0xff] %v416
    // Predicated region
    $region26: #{tpu_custom_call.1} parent=1 // pred_check
      %p433 = pneg %p44
    $region27: #{tpu_custom_call.1} parent=1 // pred_check_branch
      %435 = sbr.rel (%p433) target = $region29
    $region28: #{tpu_custom_call.1} parent=1 // pred_region
      %v436 = vld [vmem:[#allocation2] sm:$0xff]
      %v437 = vld [vmem:[#allocation2 + $0x8] sm:$0xff]
      %v438 = vld [vmem:[#allocation2 + $0x10] sm:$0xff]
      %v439 = vld [vmem:[#allocation2 + $0x18] sm:$0xff]
      %v440 = vld [vmem:[#allocation2 + $0x20] sm:$0xff]
      %v441 = vld [vmem:[#allocation2 + $0x28] sm:$0xff]
      %v442 = vld [vmem:[#allocation2 + $0x30] sm:$0xff]
      %v443 = vld [vmem:[#allocation2 + $0x38] sm:$0xff]
      %v444 = vld [vmem:[#allocation2 + $0x40] sm:$0xff]
      %v445 = vld [vmem:[#allocation2 + $0x48] sm:$0xff]
      %v446 = vld [vmem:[#allocation2 + $0x50] sm:$0xff]
      %v447 = vld [vmem:[#allocation2 + $0x58] sm:$0xff]
      %v448 = vld [vmem:[#allocation2 + $0x60] sm:$0xff]
      %v449 = vld [vmem:[#allocation2 + $0x68] sm:$0xff]
      %v450 = vld [vmem:[#allocation2 + $0x70] sm:$0xff]
      %v451 = vld [vmem:[#allocation2 + $0x78] sm:$0xff]
      %v452 = vld [vmem:[%s2] sm:$0x1]
      %v454 = vlaneseq
      %v455 = vshrl.u32 %v454, 7
      %v456 = vsub.s32 0, %v455
      %v457 = vrot.slane %v452, %v456
      %v459 = vadd.f32 %v436, %v457
      %v460 = vadd.f32 %v437, %v457
      %v461 = vadd.f32 %v438, %v457
      %v462 = vadd.f32 %v439, %v457
      %v463 = vadd.f32 %v440, %v457
      %v464 = vadd.f32 %v441, %v457
      %v465 = vadd.f32 %v442, %v457
      %v466 = vadd.f32 %v443, %v457
      %v467 = vadd.f32 %v444, %v457
      %v468 = vadd.f32 %v445, %v457
      %v469 = vadd.f32 %v446, %v457
      %v470 = vadd.f32 %v447, %v457
      %v471 = vadd.f32 %v448, %v457
      %v472 = vadd.f32 %v449, %v457
      %v473 = vadd.f32 %v450, %v457
      %v474 = vadd.f32 %v451, %v457
      %v475 = vmax.f32 %v459, 0.0
      %v476 = vmax.f32 %v460, 0.0
      %v477 = vmax.f32 %v461, 0.0
      %v478 = vmax.f32 %v462, 0.0
      %v479 = vmax.f32 %v463, 0.0
      %v480 = vmax.f32 %v464, 0.0
      %v481 = vmax.f32 %v465, 0.0
      %v482 = vmax.f32 %v466, 0.0
      %v483 = vmax.f32 %v467, 0.0
      %v484 = vmax.f32 %v468, 0.0
      %v485 = vmax.f32 %v469, 0.0
      %v486 = vmax.f32 %v470, 0.0
      %v487 = vmax.f32 %v471, 0.0
      %v488 = vmax.f32 %v472, 0.0
      %v489 = vmax.f32 %v473, 0.0
      %v490 = vmax.f32 %v474, 0.0
      %v491 = vpack.c.bf16 %v476, %v475
      %v492 = vpack.c.bf16 %v478, %v477
      %v493 = vpack.c.bf16 %v480, %v479
      %v494 = vpack.c.bf16 %v482, %v481
      %v495 = vpack.c.bf16 %v484, %v483
      %v496 = vpack.c.bf16 %v486, %v485
      %v497 = vpack.c.bf16 %v488, %v487
      %v498 = vpack.c.bf16 %v490, %v489
      %v507 = vunpack.c.l.b16 %v491
      %v508 = vunpack.c.h.b16 %v491
      %v509 = vunpack.c.l.b16 %v492
      %v510 = vunpack.c.h.b16 %v492
      %v511 = vunpack.c.l.b16 %v493
      %v512 = vunpack.c.h.b16 %v493
      %v513 = vunpack.c.l.b16 %v494
      %v514 = vunpack.c.h.b16 %v494
      %v515 = vunpack.c.l.b16 %v495
      %v516 = vunpack.c.h.b16 %v495
      %v517 = vunpack.c.l.b16 %v496
      %v518 = vunpack.c.h.b16 %v496
      %v519 = vunpack.c.l.b16 %v497
      %v520 = vunpack.c.h.b16 %v497
      %v521 = vunpack.c.l.b16 %v498
      %v522 = vunpack.c.h.b16 %v498
      %v523 = vpack.c.b16 %v507, %v507
      %v524 = vpack.c.b16 %v508, %v508
      %v525 = vpack.c.b16 %v509, %v509
      %v526 = vpack.c.b16 %v510, %v510
      %v527 = vpack.c.b16 %v511, %v511
      %v528 = vpack.c.b16 %v512, %v512
      %v529 = vpack.c.b16 %v513, %v513
      %v530 = vpack.c.b16 %v514, %v514
      %v531 = vpack.c.b16 %v515, %v515
      %v532 = vpack.c.b16 %v516, %v516
      %v533 = vpack.c.b16 %v517, %v517
      %v534 = vpack.c.b16 %v518, %v518
      %v535 = vpack.c.b16 %v519, %v519
      %v536 = vpack.c.b16 %v520, %v520
      %v537 = vpack.c.b16 %v521, %v521
      %v538 = vpack.c.b16 %v522, %v522
      %555 = vst [vmem:[#allocation8] sm:$0xf] %v523
      %556 = vst [vmem:[#allocation8 + $0x4] sm:$0xf] %v524
      %557 = vst [vmem:[#allocation8 + $0x8] sm:$0xf] %v525
      %558 = vst [vmem:[#allocation8 + $0xc] sm:$0xf] %v526
      %559 = vst [vmem:[#allocation8 + $0x10] sm:$0xf] %v527
      %560 = vst [vmem:[#allocation8 + $0x14] sm:$0xf] %v528
      %561 = vst [vmem:[#allocation8 + $0x18] sm:$0xf] %v529
      %562 = vst [vmem:[#allocation8 + $0x1c] sm:$0xf] %v530
      %563 = vst [vmem:[#allocation8 + $0x20] sm:$0xf] %v531
      %564 = vst [vmem:[#allocation8 + $0x24] sm:$0xf] %v532
      %565 = vst [vmem:[#allocation8 + $0x28] sm:$0xf] %v533
      %566 = vst [vmem:[#allocation8 + $0x2c] sm:$0xf] %v534
      %567 = vst [vmem:[#allocation8 + $0x30] sm:$0xf] %v535
      %568 = vst [vmem:[#allocation8 + $0x34] sm:$0xf] %v536
      %569 = vst [vmem:[#allocation8 + $0x38] sm:$0xf] %v537
      %570 = vst [vmem:[#allocation8 + $0x3c] sm:$0xf] %v538
    $region29: #{tpu_custom_call.1} parent=1 // pred_fallthru
      _
    // Predicated region
    $region30: #{tpu_custom_call.1} parent=1 // pred_check
      _
    $region31: #{tpu_custom_call.1} parent=1 // pred_check_branch
      %572 = sbr.rel (0) target = $region33
    $region32: #{tpu_custom_call.1} parent=1 // pred_region
      %s574 = ssub.s32 1024, 1024
      %575 = vsyncadd [#allocation5], %s574
      %s576 = sshll.u32 [#allocation8], 4
      %s577 = int_to_ptr.vmem [resolvable:$true] %s576
      %582 = dma.vmem_to_hbm [thread:$0]  %s577, 1024, %s3, [#allocation5], 64, 64, 4
    $region33: #{tpu_custom_call.1} parent=1 // pred_fallthru
      _
    // Predicated region
    $region34: #{tpu_custom_call.1} parent=1 // pred_check
      _
    $region35: #{tpu_custom_call.1} parent=1 // pred_check_branch
      %584 = sbr.rel (0) target = $region37
    $region36: #{tpu_custom_call.1} parent=1 // pred_region
      %585 = dma.done [#allocation5], 1024
    $region37: #{tpu_custom_call.1} parent=1 // pred_fallthru
      _
    %586 = vsyncpa [#allocation4], 1
    %587 = vsyncpa [#allocation7], 1
    %588 = vsyncpa [#allocation5], 1

</llo_original>
